<compile_context>
chip_gen: v6e
topology: v6e:2x2x1
jax: 0.10.0
libtpu: 0.0.40
codegen_flags: <defaults>
</compile_context>

<pallas_src>
import jax
import jax.numpy as jnp
from jax.experimental import pallas as pl
from jax.experimental.pallas import tpu as pltpu


def _round_up(x, m):
    return -(-x // m) * m


def comb_mix_kernel(w_ref, x_ref, m_ref, w1_ref, w2_ref, b_ref, o_ref):
    # w_ref : (2,)      f32 SMEM  -- [weights[0], weights[1]] (weights[2] folded into W/b)
    # x_ref : (tr, Cp)  self-embedding tile, lane-packed (Cp = G*Cq)
    # m_ref : (tr, Cp)  message tile, lane-packed
    # w1_ref: (Cp, Cp)  bf16 block-diag(weights[2] * W1)  -- resident across the grid
    # w2_ref: (Cp, Cp)  bf16 block-diag(weights[2] * W2)  -- resident across the grid
    # b_ref : (1, Cp)   f32 tile(weights[2] * b, G)
    x = x_ref[...].astype(jnp.float32)   # VPU work in f32 (v5e has no bf16 VALU)
    m = m_ref[...].astype(jnp.float32)
    # MXU: explicit bf16 operands, f32 accumulation -> single-pass systolic push.
    lin = (
        jnp.dot(x_ref[...].astype(jnp.bfloat16), w1_ref[...],
                preferred_element_type=jnp.float32)
        + jnp.dot(m_ref[...].astype(jnp.bfloat16), w2_ref[...],
                  preferred_element_type=jnp.float32)
        + b_ref[...]
    )
    o_ref[...] = (w_ref[0] * (x + m) + w_ref[1] * (x * m) + lin).astype(o_ref.dtype)


def comb_mix_op(self_emb, msg, weights, w1, w2, b, *, block_rows=2048,
                stream_dtype=None):
    """weights[0]*(x+m) + weights[1]*(x*m) + weights[2]*(x@W1 + m@W2 + b)."""
    N, C = self_emb.shape
    act_dtype = jnp.dtype(stream_dtype) if stream_dtype is not None else self_emb.dtype
    act_itemsize = jnp.dtype(act_dtype).itemsize

    # ---- lane-dense channel geometry: G node-groups of Cq channels per 128-lane row ----
    if C % 128 == 0:
        Cq, G = C, 1
    elif C < 128:
        Cq = 1
        while Cq < C:                    # next power of two >= C; divides 128
            Cq *= 2
        G = 128 // Cq
    else:
        Cq, G = _round_up(C, 128), 1     # pad wide channels to a multiple of 128
    Cp = G * Cq

    # ---- fold architecture weight weights[2] into the resident linear params ----
    w32 = weights.astype(jnp.float32)
    w1f = w32[2] * w1.astype(jnp.float32)
    w2f = w32[2] * w2.astype(jnp.float32)
    bf = w32[2] * b.astype(jnp.float32)
    if Cq != C:                          # zero-pad channels (exact: padded rows/cols are 0)
        w1f = jnp.pad(w1f, ((0, Cq - C), (0, Cq - C)))
        w2f = jnp.pad(w2f, ((0, Cq - C), (0, Cq - C)))
        bf = jnp.pad(bf, (0, Cq - C))
    if G > 1:
        eye = jnp.eye(G, dtype=jnp.float32)
        w1p = jnp.kron(eye, w1f)         # (Cp, Cp) block-diagonal
        w2p = jnp.kron(eye, w2f)
        bp = jnp.tile(bf, (G,))
    else:
        w1p, w2p, bp = w1f, w2f, bf
    w1p = w1p.astype(jnp.bfloat16)       # bf16 MXU operands, half the resident VMEM
    w2p = w2p.astype(jnp.bfloat16)
    bp = bp.reshape(1, Cp).astype(jnp.float32)

    # ---- row packing: pad N only up to a multiple of 8*G elements (<= 8*G-1 rows) ----
    rows = _round_up(-(-N // G), 8)      # ceil(N/G) packed rows, 8-sublane aligned
    n_pack = rows * G

    def pack(a):
        a = a.astype(act_dtype)
        if Cq != C:
            a = jnp.pad(a, ((0, 0), (0, Cq - C)))
        if n_pack != N:
            a = jnp.pad(a, ((0, n_pack - N), (0, 0)))
        return a.reshape(rows, Cp)

    xp = pack(self_emb)
    mp = pack(msg)
    w01 = w32[:2]

    # ---- row-tile sizing ----
    # Double-buffer budget: 2 buffers x 3 streamed arrays x tr*Cp*itemsize <= ~12 MiB,
    # which fits v5e's 16 MiB scoped-VMEM default and is well inside v6e/v7x limits.
    tr_vmem_max = max(8, ((12 << 20) // (6 * Cp * act_itemsize)) // 8 * 8)
    tr = min(_round_up(min(block_rows, rows), 8), tr_vmem_max, rows)
    # v7x megacore: keep the "parallel" grid at >= 2 steps so both TensorCores get work.
    if -(-rows // tr) < 2 and rows > 8:
        tr = _round_up(-(-rows // 2), 8)
    num_steps = -(-rows // tr)           # boundary block (if rows % tr != 0) is masked;
                                         # safe: matmul + elementwise are row-local.

    grid_spec = pltpu.PrefetchScalarGridSpec(
        num_scalar_prefetch=0,
        grid=(num_steps,),
        in_specs=[
            pl.BlockSpec(memory_space=pltpu.MemorySpace.SMEM),  # [w0, w1]
            pl.BlockSpec((tr, Cp), lambda i: (i, 0)),           # x tile
            pl.BlockSpec((tr, Cp), lambda i: (i, 0)),           # m tile
            pl.BlockSpec((Cp, Cp), lambda i: (0, 0)),           # W1 block-diag (resident)
            pl.BlockSpec((Cp, Cp), lambda i: (0, 0)),           # W2 block-diag (resident)
            pl.BlockSpec((1, Cp), lambda i: (0, 0)),            # bias (resident)
        ],
        out_specs=pl.BlockSpec((tr, Cp), lambda i: (i, 0)),
    )

    out = pl.pallas_call(
        comb_mix_kernel,
        out_shape=jax.ShapeDtypeStruct((rows, Cp), act_dtype),
        grid_spec=grid_spec,
        compiler_params=pltpu.CompilerParams(
            dimension_semantics=("parallel",),
        ),
    )(w01, xp, mp, w1p, w2p, bp)

    out = out.reshape(n_pack, Cq)
    if n_pack != N or Cq != C:
        out = out[:N, :C]
    return out


# ----------------------------- references for testing -----------------------------
def comb_mix_ref_f32(self_emb, msg, weights, w1, w2, b):
    lin = self_emb @ w1 + msg @ w2 + b.reshape(1, -1)
    return (weights[0] * (self_emb + msg)
            + weights[1] * (self_emb * msg)
            + weights[2] * lin)


def comb_mix_ref_bf16mm(self_emb, msg, weights, w1, w2, b):
    # Matches the kernel's explicit bf16 MXU operands (weights[2] folded pre-cast,
    # f32 accumulation); elementwise path in f32.
    w1f = (weights[2] * w1).astype(jnp.bfloat16)
    w2f = (weights[2] * w2).astype(jnp.bfloat16)
    lin = (jnp.dot(self_emb.astype(jnp.bfloat16), w1f, preferred_element_type=jnp.float32)
           + jnp.dot(msg.astype(jnp.bfloat16), w2f, preferred_element_type=jnp.float32)
           + (weights[2] * b).reshape(1, -1))
    return weights[0] * (self_emb + msg) + weights[1] * (self_emb * msg) + lin


if __name__ == "__main__":
    C = 32  # hidden (out_channels)
    key = jax.random.PRNGKey(0)
    k_x, k_m, k_w, k_w1, k_w2, k_b = jax.random.split(key, 6)

    # architecture weights over the 3 combine primitives (softmax, DARTS-style mixing)
    weights = jax.nn.softmax(jax.random.normal(k_w, (3,), dtype=jnp.float32))

    # nn.Linear(2C, C) default init: U(-1/sqrt(2C), 1/sqrt(2C)); split into two halves.
    bound = 1.0 / jnp.sqrt(2.0 * C)
    w1 = jax.random.uniform(k_w1, (C, C), jnp.float32, -bound, bound)
    w2 = jax.random.uniform(k_w2, (C, C), jnp.float32, -bound, bound)
    b = jax.random.uniform(k_b, (C,), jnp.float32, -bound, bound)

    # case 1: N=128, small block_rows so the test exercises a multi-step grid.
    N1 = 128
    x1 = jax.random.normal(k_x, (N1, C), dtype=jnp.float32)
    m1 = jax.random.normal(k_m, (N1, C), dtype=jnp.float32)
    out1 = jax.block_until_ready(comb_mix_op(x1, m1, weights, w1, w2, b, block_rows=16))
    ref1_mm = comb_mix_ref_bf16mm(x1, m1, weights, w1, w2, b)
    ref1_f32 = comb_mix_ref_f32(x1, m1, weights, w1, w2, b)
    assert out1.shape == (N1, C)
    assert jnp.allclose(out1, ref1_mm, atol=1e-3, rtol=1e-3), "mismatch vs bf16-mm ref (N=128)"
    assert jnp.allclose(out1, ref1_f32, atol=3e-2, rtol=3e-2), "mismatch vs f32 ref (N=128)"

    # case 2: default block_rows (exercises the >=2-grid-step shrink for megacore).
    out1b = jax.block_until_ready(comb_mix_op(x1, m1, weights, w1, w2, b))
    assert jnp.allclose(out1b, ref1_mm, atol=1e-3, rtol=1e-3), "mismatch (default tile)"

    # case 3: ragged N (exercises the minimal-padding + boundary-masking path).
    N2 = 100
    x2, m2 = x1[:N2], m1[:N2]
    out2 = jax.block_until_ready(comb_mix_op(x2, m2, weights, w1, w2, b, block_rows=16))
    ref2_mm = comb_mix_ref_bf16mm(x2, m2, weights, w1, w2, b)
    assert out2.shape == (N2, C)
    assert jnp.allclose(out2, ref2_mm, atol=1e-3, rtol=1e-3), "mismatch (N=100)"

    # case 4: bf16 streaming path (half the HBM bytes; looser tolerance).
    out3 = jax.block_until_ready(
        comb_mix_op(x1, m1, weights, w1, w2, b, block_rows=16,
                    stream_dtype=jnp.bfloat16))
    assert out3.dtype == jnp.bfloat16 and out3.shape == (N1, C)
    assert jnp.allclose(out3.astype(jnp.float32), ref1_f32, atol=1e-1, rtol=1e-1), \
        "mismatch (bf16 stream)"

    print("KERNEL_OK")
</pallas_src>

<mosaic_0001>
module attributes {stable_mosaic.version = 11 : i64} {
  func.func @comb_mix_kernel(%arg0: i32, %arg1: memref<2xf32, #tpu.memory_space<smem>>, %arg2: memref<16x128xf32, #tpu.memory_space<vmem>>, %arg3: memref<16x128xf32, #tpu.memory_space<vmem>>, %arg4: memref<128x128xbf16, #tpu.memory_space<vmem>>, %arg5: memref<128x128xbf16, #tpu.memory_space<vmem>>, %arg6: memref<1x128xf32, #tpu.memory_space<vmem>>, %arg7: memref<16x128xf32, #tpu.memory_space<vmem>>) attributes {dimension_semantics = [#tpu.dimension_semantics<parallel>], iteration_bounds = array<i64: 2>, scalar_prefetch = 0 : i64, scratch_operands = 0 : i64, tpu.core_type = #tpu.core_type<tc>, window_params = [{transform_indices = @transform_0, window_bounds = array<i64: 2>}, {transform_indices = @transform_1, window_bounds = array<i64: 16, 128>}, {transform_indices = @transform_2, window_bounds = array<i64: 16, 128>}, {pipeline_mode = #tpu.pipeline_mode<synchronous>, transform_indices = @transform_3, window_bounds = array<i64: 128, 128>}, {pipeline_mode = #tpu.pipeline_mode<synchronous>, transform_indices = @transform_4, window_bounds = array<i64: 128, 128>}, {pipeline_mode = #tpu.pipeline_mode<synchronous>, transform_indices = @transform_5, window_bounds = array<i64: 1, 128>}, {transform_indices = @transform_6, window_bounds = array<i64: 16, 128>}]} {
    %c0 = arith.constant 0 : index
    %c0_0 = arith.constant 0 : index
    %0 = vector.load %arg2[%c0, %c0_0] : memref<16x128xf32, #tpu.memory_space<vmem>>, vector<16x128xf32>
    %c0_1 = arith.constant 0 : index
    %c0_2 = arith.constant 0 : index
    %1 = vector.load %arg3[%c0_1, %c0_2] : memref<16x128xf32, #tpu.memory_space<vmem>>, vector<16x128xf32>
    %c0_3 = arith.constant 0 : index
    %c0_4 = arith.constant 0 : index
    %2 = vector.load %arg2[%c0_3, %c0_4] : memref<16x128xf32, #tpu.memory_space<vmem>>, vector<16x128xf32>
    %3 = arith.truncf %2 : vector<16x128xf32> to vector<16x128xbf16>
    %c0_5 = arith.constant 0 : index
    %c0_6 = arith.constant 0 : index
    %4 = vector.load %arg4[%c0_5, %c0_6] : memref<128x128xbf16, #tpu.memory_space<vmem>>, vector<128x128xbf16>
    %cst = arith.constant dense<0.000000e+00> : vector<16x128xf32>
    %5 = tpu.matmul %3, %4, %cst {dimension_numbers = #tpu.dot_dimension_numbers<[1], [0], [0], [1], [0, 0, 1, 1], [], []>} : vector<16x128xbf16>, vector<128x128xbf16>, vector<16x128xf32> -> vector<16x128xf32>
    %c0_7 = arith.constant 0 : index
    %c0_8 = arith.constant 0 : index
    %6 = vector.load %arg3[%c0_7, %c0_8] : memref<16x128xf32, #tpu.memory_space<vmem>>, vector<16x128xf32>
    %7 = arith.truncf %6 : vector<16x128xf32> to vector<16x128xbf16>
    %c0_9 = arith.constant 0 : index
    %c0_10 = arith.constant 0 : index
    %8 = vector.load %arg5[%c0_9, %c0_10] : memref<128x128xbf16, #tpu.memory_space<vmem>>, vector<128x128xbf16>
    %cst_11 = arith.constant dense<0.000000e+00> : vector<16x128xf32>
    %9 = tpu.matmul %7, %8, %cst_11 {dimension_numbers = #tpu.dot_dimension_numbers<[1], [0], [0], [1], [0, 0, 1, 1], [], []>} : vector<16x128xbf16>, vector<128x128xbf16>, vector<16x128xf32> -> vector<16x128xf32>
    %10 = arith.addf %5, %9 : vector<16x128xf32>
    %c0_12 = arith.constant 0 : index
    %c0_13 = arith.constant 0 : index
    %11 = vector.load %arg6[%c0_12, %c0_13] : memref<1x128xf32, #tpu.memory_space<vmem>>, vector<1x128xf32>
    %12 = vector.broadcast %11 : vector<1x128xf32> to vector<16x128xf32>
    %13 = arith.addf %10, %12 : vector<16x128xf32>
    %c0_14 = arith.constant 0 : index
    %14 = memref.load %arg1[%c0_14] : memref<2xf32, #tpu.memory_space<smem>>
    %15 = arith.addf %0, %1 : vector<16x128xf32>
    %16 = vector.broadcast %14 : f32 to vector<16x128xf32>
    %17 = arith.mulf %16, %15 : vector<16x128xf32>
    %c1 = arith.constant 1 : index
    %18 = memref.load %arg1[%c1] : memref<2xf32, #tpu.memory_space<smem>>
    %19 = arith.mulf %0, %1 : vector<16x128xf32>
    %20 = vector.broadcast %18 : f32 to vector<16x128xf32>
    %21 = arith.mulf %20, %19 : vector<16x128xf32>
    %22 = arith.addf %17, %21 : vector<16x128xf32>
    %23 = arith.addf %22, %13 : vector<16x128xf32>
    %c0_15 = arith.constant 0 : index
    %c0_16 = arith.constant 0 : index
    %24 = vector.load %arg7[%c0_15, %c0_16] : memref<16x128xf32, #tpu.memory_space<vmem>>, vector<16x128xf32>
    tpu.vector_store %arg7[%c0_15, %c0_16], %23 {strides = array<i32>} : memref<16x128xf32, #tpu.memory_space<vmem>>, vector<16x128xf32>,
    return
  }
  func.func @transform_0(%arg0: i32) -> i32 {
    %c0_i32 = arith.constant 0 : i32
    %c0_i32_0 = arith.constant 0 : i32
    return %c0_i32 : i32
  }
  func.func @transform_1(%arg0: i32) -> (i32, i32) {
    %c0_i32 = arith.constant 0 : i32
    %c0_i32_0 = arith.constant 0 : i32
    return %arg0, %c0_i32 : i32, i32
  }
  func.func @transform_2(%arg0: i32) -> (i32, i32) {
    %c0_i32 = arith.constant 0 : i32
    %c0_i32_0 = arith.constant 0 : i32
    return %arg0, %c0_i32 : i32, i32
  }
  func.func @transform_3(%arg0: i32) -> (i32, i32) {
    %c0_i32 = arith.constant 0 : i32
    %c0_i32_0 = arith.constant 0 : i32
    %c0_i32_1 = arith.constant 0 : i32
    return %c0_i32, %c0_i32_0 : i32, i32
  }
  func.func @transform_4(%arg0: i32) -> (i32, i32) {
    %c0_i32 = arith.constant 0 : i32
    %c0_i32_0 = arith.constant 0 : i32
    %c0_i32_1 = arith.constant 0 : i32
    return %c0_i32, %c0_i32_0 : i32, i32
  }
  func.func @transform_5(%arg0: i32) -> (i32, i32) {
    %c0_i32 = arith.constant 0 : i32
    %c0_i32_0 = arith.constant 0 : i32
    %c0_i32_1 = arith.constant 0 : i32
    return %c0_i32, %c0_i32_0 : i32, i32
  }
  func.func @transform_6(%arg0: i32) -> (i32, i32) {
    %c0_i32 = arith.constant 0 : i32
    %c0_i32_0 = arith.constant 0 : i32
    return %arg0, %c0_i32 : i32, i32
  }
}

</mosaic_0001>

<llo_original>
// kernel: tpu_custom_call.1
$region0: #{tpu_custom_call.1}
  #allocation0 [shape = 'u32[]', space=smem, size = 0x4, offset = 0x4, fixed_abs, tag = 'smem constant byte address 0x4 - core index']
  #allocation1 [shape = 'u32[144,128]{1,0:T(1,128)}', space=vmem, size = 0x12000, scoped, tag = 'internal scratch']
  %s0 = inlined_call_operand.hbm [shape: f32[2], index: 0, kind: input, shape index: {}]
  %s1 = inlined_call_operand.hbm [shape: f32[32,128], index: 1, kind: input, shape index: {}]
  %s2 = inlined_call_operand.hbm [shape: f32[32,128], index: 2, kind: input, shape index: {}]
  %s3 = inlined_call_operand.hbm [shape: bf16[128,128], index: 3, kind: input, shape index: {}]
  %s4 = inlined_call_operand.hbm [shape: bf16[128,128], index: 4, kind: input, shape index: {}]
  %s5 = inlined_call_operand.vmem [shape: f32[1,128], index: 5, kind: input, shape index: {}]
  %s6 = inlined_call_operand.hbm [shape: f32[32,128], index: 6, kind: output, shape index: {}]
  %s7 = sld [smem:[#allocation0]]
  $region77: #{tpu_custom_call.1} parent=0
    _
  %s9 = ssub.s32 1, %s7
  %s10 = scalar_select 0, %s9, %s7
  $region1: #{tpu_custom_call.1} parent=0
    #allocation2 [shape = 'u8[512]{0}', space=smem, size = 0x200, scoped, tag = 'input window, operand 0, single buffered']
    #allocation3 [shape = 's32[2]{0}', space=sflag, size = 0x8, scoped, tag = 'scoped memory for tpu_custom_call.1']
    #allocation4 [shape = 's32[2]{0}', space=sflag, size = 0x8, scoped, tag = 'scoped memory for tpu_custom_call.1']
    #allocation5 [shape = 's32[2]{0}', space=sflag, size = 0x8, scoped, tag = 'scoped memory for tpu_custom_call.1']
    #allocation6 [shape = 'u8[16384]{0}', space=vmem, size = 0x4000, scoped, tag = 'input window, operand 1']
    #allocation7 [shape = 'u8[16384]{0}', space=vmem, size = 0x4000, scoped, tag = 'input window, operand 2']
    #allocation8 [shape = 's32[2]{0}', space=sflag, size = 0x8, scoped, tag = 'scoped memory for tpu_custom_call.1']
    #allocation9 [shape = 'u8[32768]{0}', space=vmem, size = 0x8000, scoped, tag = 'input window, operand 3, single buffered']
    #allocation10 [shape = 'u8[32768]{0}', space=vmem, size = 0x8000, scoped, tag = 'input window, operand 4, single buffered']
    #allocation11 [shape = 's32[1]{0}', space=sflag, size = 0x4, scoped, tag = 'scoped memory for tpu_custom_call.1']
    #allocation12 [shape = 'u8[16384]{0}', space=vmem, size = 0x4000, scoped, tag = 'output window, operand 0']
    %11 = vsyncpa [#allocation5], 0
    %12 = vsyncpa [#allocation3], 0
    %s13 = scalar_lea.sflag [#allocation3], 1
    %14 = vsyncpa %s13, 0
    %15 = vsyncpa [#allocation8], 0
    %s16 = scalar_lea.sflag [#allocation8], 1
    %17 = vsyncpa %s16, 0
    %18 = vsyncpa [#allocation11], 0
    %19 = vsyncpa [#allocation4], 0
    %s20 = scalar_lea.sflag [#allocation4], 1
    %21 = vsyncpa %s20, 0
    loop: start=0, step=1, limit=4
    $region2: #{tpu_custom_call.1} parent=1 // loop_pre_header
      _
    $region3: #{tpu_custom_call.1} parent=1 // loop_header
      %s23 = sphi 0, %s27
      %p24 = scmp.ge.s32.totalorder %s23, 4
      %s31 = sphi 0, %s31
      %s33 = sphi 0, %s31
      %s34 = sphi 0, %s33
      %s48 = sphi 0, %s34
      %s54 = sphi 0, %s56
      %s57 = sphi 0, %s54
      %s58 = sphi 0, %s57
      %s74 = sphi 0, %s58
      %s80 = sphi 0, %s82
      %s83 = sphi 0, %s80
      %s84 = sphi 0, %s83
      %s100 = sphi 0, %s84
      %s104 = sphi 0, %s104
      %s106 = sphi 0, %s104
      %s107 = sphi 0, %s106
      %s121 = sphi 0, %s107
      %s125 = sphi 0, %s125
      %s127 = sphi 0, %s125
      %s128 = sphi 0, %s127
      %s142 = sphi 0, %s128
      %s146 = sphi 0, %s146
      %s148 = sphi 0, %s146
      %s149 = sphi 0, %s148
      %s163 = sphi 0, %s149
      %s169 = sphi 0, %s171
      %s172 = sphi 0, %s169
      %s173 = sphi 0, %s172
      %s189 = sphi 0, %s173
    $region4: #{tpu_custom_call.1} parent=1 // loop_header_branch
      %26 = sbr.rel (%p24) target = $region8
    $region5: #{tpu_custom_call.1} parent=1 // loop_body
      %s28 = ssub.s32 %s23, 1
      %s29 = ssub.s32 %s23, 2
      %s30 = sadd.s32 %s23, 1
      %s32 = sadd.s32 %s31, 1
      %p35 = scmp.eq.s32.totalorder %s23, 1
      %p36 = scmp.ne.s32.totalorder %s31, %s33
      %p37 = scmp.eq.s32.totalorder %s23, 0
      %p38 = por %p36, %p37
      %p39 = scmp.ne.s32.totalorder %s31, %s33
      %p40 = scmp.eq.s32.totalorder %s28, 1
      %p41 = por %p39, %p40
      %p42 = scmp.ne.s32.totalorder %s33, %s34
      %p43 = scmp.eq.s32.totalorder %s28, 0
      %p44 = por %p42, %p43
      %p45 = scmp.ne.s32.totalorder %s33, %s34
      %p46 = scmp.eq.s32.totalorder %s29, 1
      %p47 = por %p45, %p46
      %p49 = scmp.ne.s32.totalorder %s34, %s48
      %p50 = scmp.eq.s32.totalorder %s29, 0
      %p51 = por %p49, %p50
      %s52 = ssub.s32 %s23, %s30
      %p53 = scmp.eq.s32.totalorder %s52, 0
      %s55 = sadd.s32 %s54, 1
      %s56 = scalar_select %p53, %s54, %s55
      %p59 = pneg %p53
      %p60 = scmp.eq.s32.totalorder %s23, 1
      %p61 = por %p59, %p60
      %p62 = scmp.ne.s32.totalorder %s54, %s57
      %p63 = scmp.eq.s32.totalorder %s23, 0
      %p64 = por %p62, %p63
      %p65 = scmp.ne.s32.totalorder %s54, %s57
      %p66 = scmp.eq.s32.totalorder %s28, 1
      %p67 = por %p65, %p66
      %p68 = scmp.ne.s32.totalorder %s57, %s58
      %p69 = scmp.eq.s32.totalorder %s28, 0
      %p70 = por %p68, %p69
      %p71 = scmp.ne.s32.totalorder %s57, %s58
      %p72 = scmp.eq.s32.totalorder %s29, 1
      %p73 = por %p71, %p72
      %p75 = scmp.ne.s32.totalorder %s58, %s74
      %p76 = scmp.eq.s32.totalorder %s29, 0
      %p77 = por %p75, %p76
      %s78 = ssub.s32 %s23, %s30
      %p79 = scmp.eq.s32.totalorder %s78, 0
      %s81 = sadd.s32 %s80, 1
      %s82 = scalar_select %p79, %s80, %s81
      %p85 = pneg %p79
      %p86 = scmp.eq.s32.totalorder %s23, 1
      %p87 = por %p85, %p86
      %p88 = scmp.ne.s32.totalorder %s80, %s83
      %p89 = scmp.eq.s32.totalorder %s23, 0
      %p90 = por %p88, %p89
      %p91 = scmp.ne.s32.totalorder %s80, %s83
      %p92 = scmp.eq.s32.totalorder %s28, 1
      %p93 = por %p91, %p92
      %p94 = scmp.ne.s32.totalorder %s83, %s84
      %p95 = scmp.eq.s32.totalorder %s28, 0
      %p96 = por %p94, %p95
      %p97 = scmp.ne.s32.totalorder %s83, %s84
      %p98 = scmp.eq.s32.totalorder %s29, 1
      %p99 = por %p97, %p98
      %p101 = scmp.ne.s32.totalorder %s84, %s100
      %p102 = scmp.eq.s32.totalorder %s29, 0
      %p103 = por %p101, %p102
      %s105 = sadd.s32 %s104, 1
      %p108 = scmp.eq.s32.totalorder %s23, 1
      %p109 = scmp.ne.s32.totalorder %s104, %s106
      %p110 = scmp.eq.s32.totalorder %s23, 0
      %p111 = por %p109, %p110
      %p112 = scmp.ne.s32.totalorder %s104, %s106
      %p113 = scmp.eq.s32.totalorder %s28, 1
      %p114 = por %p112, %p113
      %p115 = scmp.ne.s32.totalorder %s106, %s107
      %p116 = scmp.eq.s32.totalorder %s28, 0
      %p117 = por %p115, %p116
      %p118 = scmp.ne.s32.totalorder %s106, %s107
      %p119 = scmp.eq.s32.totalorder %s29, 1
      %p120 = por %p118, %p119
      %p122 = scmp.ne.s32.totalorder %s107, %s121
      %p123 = scmp.eq.s32.totalorder %s29, 0
      %p124 = por %p122, %p123
      %s126 = sadd.s32 %s125, 1
      %p129 = scmp.eq.s32.totalorder %s23, 1
      %p130 = scmp.ne.s32.totalorder %s125, %s127
      %p131 = scmp.eq.s32.totalorder %s23, 0
      %p132 = por %p130, %p131
      %p133 = scmp.ne.s32.totalorder %s125, %s127
      %p134 = scmp.eq.s32.totalorder %s28, 1
      %p135 = por %p133, %p134
      %p136 = scmp.ne.s32.totalorder %s127, %s128
      %p137 = scmp.eq.s32.totalorder %s28, 0
      %p138 = por %p136, %p137
      %p139 = scmp.ne.s32.totalorder %s127, %s128
      %p140 = scmp.eq.s32.totalorder %s29, 1
      %p141 = por %p139, %p140
      %p143 = scmp.ne.s32.totalorder %s128, %s142
      %p144 = scmp.eq.s32.totalorder %s29, 0
      %p145 = por %p143, %p144
      %s147 = sadd.s32 %s146, 1
      %p150 = scmp.eq.s32.totalorder %s23, 1
      %p151 = scmp.ne.s32.totalorder %s146, %s148
      %p152 = scmp.eq.s32.totalorder %s23, 0
      %p153 = por %p151, %p152
      %p154 = scmp.ne.s32.totalorder %s146, %s148
      %p155 = scmp.eq.s32.totalorder %s28, 1
      %p156 = por %p154, %p155
      %p157 = scmp.ne.s32.totalorder %s148, %s149
      %p158 = scmp.eq.s32.totalorder %s28, 0
      %p159 = por %p157, %p158
      %p160 = scmp.ne.s32.totalorder %s148, %s149
      %p161 = scmp.eq.s32.totalorder %s29, 1
      %p162 = por %p160, %p161
      %p164 = scmp.ne.s32.totalorder %s149, %s163
      %p165 = scmp.eq.s32.totalorder %s29, 0
      %p166 = por %p164, %p165
      %s167 = ssub.s32 %s23, %s30
      %p168 = scmp.eq.s32.totalorder %s167, 0
      %s170 = sadd.s32 %s169, 1
      %s171 = scalar_select %p168, %s169, %s170
      %p174 = pneg %p168
      %p175 = scmp.eq.s32.totalorder %s23, 1
      %p176 = por %p174, %p175
      %p177 = scmp.ne.s32.totalorder %s169, %s172
      %p178 = scmp.eq.s32.totalorder %s23, 0
      %p179 = por %p177, %p178
      %p180 = scmp.ne.s32.totalorder %s169, %s172
      %p181 = scmp.eq.s32.totalorder %s28, 1
      %p182 = por %p180, %p181
      %p183 = scmp.ne.s32.totalorder %s172, %s173
      %p184 = scmp.eq.s32.totalorder %s28, 0
      %p185 = por %p183, %p184
      %p186 = scmp.ne.s32.totalorder %s172, %s173
      %p187 = scmp.eq.s32.totalorder %s29, 1
      %p188 = por %p186, %p187
      %p190 = scmp.ne.s32.totalorder %s173, %s189
      %p191 = scmp.eq.s32.totalorder %s29, 0
      %p192 = por %p190, %p191
      %p193 = scmp.le.s32.totalorder 1, %s23
      %p194 = scmp.lt.s32.totalorder %s23, 3
      %p195 = pnand %p193, %p194
      %p196 = pneg %p195
      // Predicated region
      $region9: #{tpu_custom_call.1} parent=5 // pred_check
        _
      $region10: #{tpu_custom_call.1} parent=5 // pred_check_branch
        %198 = sbr.rel (%p195) target = $region12
      $region11: #{tpu_custom_call.1} parent=5 // pred_region
        %s199 = ssub.s32 %s23, 1
        // Predicated region
        $region13: #{tpu_custom_call.1} parent=11 // pred_check
          %p200 = pneg %p44
        $region14: #{tpu_custom_call.1} parent=11 // pred_check_branch
          %202 = sbr.rel (%p200) target = $region16
        $region15: #{tpu_custom_call.1} parent=11 // pred_region
          %s204 = ssub.s32 16, 16
          %205 = vsyncadd [#allocation5], %s204
          %208 = dma.hbm_to_smem %s0, 16, [#allocation2], [#allocation5]
        $region16: #{tpu_custom_call.1} parent=11 // pred_fallthru
          _
        // Predicated region
        $region17: #{tpu_custom_call.1} parent=11 // pred_check
          %p209 = pneg %p117
        $region18: #{tpu_custom_call.1} parent=11 // pred_check_branch
          %211 = sbr.rel (%p209) target = $region20
        $region19: #{tpu_custom_call.1} parent=11 // pred_region
          %s213 = ssub.s32 1024, 1024
          %214 = vsyncadd [#allocation8], %s213
          %s215 = sshll.u32 [#allocation9], 4
          %s216 = int_to_ptr.vmem [resolvable:$true] %s215
          %221 = dma.hbm_to_vmem [thread:$0]  %s3, 1024, %s216, [#allocation8], 64, 64, 4
        $region20: #{tpu_custom_call.1} parent=11 // pred_fallthru
          _
        // Predicated region
        $region21: #{tpu_custom_call.1} parent=11 // pred_check
          %p222 = pneg %p138
        $region22: #{tpu_custom_call.1} parent=11 // pred_check_branch
          %224 = sbr.rel (%p222) target = $region24
        $region23: #{tpu_custom_call.1} parent=11 // pred_region
          %s226 = ssub.s32 1024, 1024
          %227 = vsyncadd [#allocation11], %s226
          %s228 = sshll.u32 [#allocation10], 4
          %s229 = int_to_ptr.vmem [resolvable:$true] %s228
          %234 = dma.hbm_to_vmem [thread:$0]  %s4, 1024, %s229, [#allocation11], 64, 64, 4
        $region24: #{tpu_custom_call.1} parent=11 // pred_fallthru
          _
        // Predicated region
        $region25: #{tpu_custom_call.1} parent=11 // pred_check
          %p235 = pneg %p159
        $region26: #{tpu_custom_call.1} parent=11 // pred_check_branch
          %237 = sbr.rel (%p235) target = $region28
        $region27: #{tpu_custom_call.1} parent=11 // pred_region
          _
        $region28: #{tpu_custom_call.1} parent=11 // pred_fallthru
          _
      $region12: #{tpu_custom_call.1} parent=5 // pred_fallthru
        _
      %p238 = scmp.lt.s32.totalorder %s23, 2
      // Predicated region
      $region29: #{tpu_custom_call.1} parent=5 // pred_check
        %p239 = pneg %p238
      $region30: #{tpu_custom_call.1} parent=5 // pred_check_branch
        %241 = sbr.rel (%p239) target = $region32
      $region31: #{tpu_custom_call.1} parent=5 // pred_region
        // Predicated region
        $region33: #{tpu_custom_call.1} parent=31 // pred_check
          %p242 = pneg %p64
        $region34: #{tpu_custom_call.1} parent=31 // pred_check_branch
          %244 = sbr.rel (%p242) target = $region36
        $region35: #{tpu_custom_call.1} parent=31 // pred_region
          %s245 = sand.u32 %s54, 1
          %s246 = scalar_lea.sflag [#allocation3], %s245
          %s247 = sand.u32 %s54, 1
          %s248 = smul.addr %s247, 16
          %s249 = scalar_lea.vmem [#allocation6], %s248
          %s250 = smul.u32 2, %s23
          %s252 = ssub.s32 256, 256
          %253 = vsyncadd %s246, %s252
          %s254 = smul.addr %s250, 128
          %s255 = scalar_lea.hbm %s1, %s254
          %s256 = sshll.u32 %s249, 4
          %s257 = int_to_ptr.vmem [resolvable:$true] %s256
          %262 = dma.hbm_to_vmem [thread:$0]  %s255, 256, %s257, %s246, 128, 128, 8
        $region36: #{tpu_custom_call.1} parent=31 // pred_fallthru
          _
        // Predicated region
        $region37: #{tpu_custom_call.1} parent=31 // pred_check
          %p263 = pneg %p90
        $region38: #{tpu_custom_call.1} parent=31 // pred_check_branch
          %265 = sbr.rel (%p263) target = $region40
        $region39: #{tpu_custom_call.1} parent=31 // pred_region
          %s266 = sand.u32 %s23, 1
          %s267 = scalar_lea.sflag [#allocation8], %s266
          %s268 = sand.u32 %s80, 1
          %s269 = smul.addr %s268, 16
          %s270 = scalar_lea.vmem [#allocation7], %s269
          %s271 = smul.u32 2, %s23
          %s273 = ssub.s32 256, 256
          %274 = vsyncadd %s267, %s273
          %s275 = smul.addr %s271, 128
          %s276 = scalar_lea.hbm %s2, %s275
          %s277 = sshll.u32 %s270, 4
          %s278 = int_to_ptr.vmem [resolvable:$true] %s277
          %283 = dma.hbm_to_vmem [thread:$0]  %s276, 256, %s278, %s267, 128, 128, 8
        $region40: #{tpu_custom_call.1} parent=31 // pred_fallthru
          _
      $region32: #{tpu_custom_call.1} parent=5 // pred_fallthru
        _
      %p284 = scmp.le.s32.totalorder 1, %s23
      %p285 = scmp.lt.s32.totalorder %s23, 3
      %p286 = pnand %p284, %p285
      %p287 = pneg %p286
      // Predicated region
      $region41: #{tpu_custom_call.1} parent=5 // pred_check
        _
      $region42: #{tpu_custom_call.1} parent=5 // pred_check_branch
        %289 = sbr.rel (%p286) target = $region44
      $region43: #{tpu_custom_call.1} parent=5 // pred_region
        %s290 = ssub.s32 %s23, 1
        // Predicated region
        $region45: #{tpu_custom_call.1} parent=43 // pred_check
          %p291 = pneg %p44
        $region46: #{tpu_custom_call.1} parent=43 // pred_check_branch
          %293 = sbr.rel (%p291) target = $region48
        $region47: #{tpu_custom_call.1} parent=43 // pred_region
          %294 = dma.done [#allocation5], 16
        $region48: #{tpu_custom_call.1} parent=43 // pred_fallthru
          _
        %s295 = sand.u32 %s57, 1
        %s296 = scalar_lea.sflag [#allocation3], %s295
        %s297 = sand.u32 %s57, 1
        %s298 = smul.addr %s297, 16
        %s299 = scalar_lea.vmem [#allocation6], %s298
        // Predicated region
        $region49: #{tpu_custom_call.1} parent=43 // pred_check
          %p300 = pneg %p70
        $region50: #{tpu_custom_call.1} parent=43 // pred_check_branch
          %302 = sbr.rel (%p300) target = $region52
        $region51: #{tpu_custom_call.1} parent=43 // pred_region
          %303 = dma.done %s296, 256
        $region52: #{tpu_custom_call.1} parent=43 // pred_fallthru
          _
        %s304 = sand.u32 %s28, 1
        %s305 = scalar_lea.sflag [#allocation8], %s304
        %s306 = sand.u32 %s83, 1
        %s307 = smul.addr %s306, 16
        %s308 = scalar_lea.vmem [#allocation7], %s307
        // Predicated region
        $region53: #{tpu_custom_call.1} parent=43 // pred_check
          %p309 = pneg %p96
        $region54: #{tpu_custom_call.1} parent=43 // pred_check_branch
          %311 = sbr.rel (%p309) target = $region56
        $region55: #{tpu_custom_call.1} parent=43 // pred_region
          %312 = dma.done %s305, 256
        $region56: #{tpu_custom_call.1} parent=43 // pred_fallthru
          _
        // Predicated region
        $region57: #{tpu_custom_call.1} parent=43 // pred_check
          %p313 = pneg %p117
        $region58: #{tpu_custom_call.1} parent=43 // pred_check_branch
          %315 = sbr.rel (%p313) target = $region60
        $region59: #{tpu_custom_call.1} parent=43 // pred_region
          %316 = dma.done [#allocation8], 1024
        $region60: #{tpu_custom_call.1} parent=43 // pred_fallthru
          _
        // Predicated region
        $region61: #{tpu_custom_call.1} parent=43 // pred_check
          %p317 = pneg %p138
        $region62: #{tpu_custom_call.1} parent=43 // pred_check_branch
          %319 = sbr.rel (%p317) target = $region64
        $region63: #{tpu_custom_call.1} parent=43 // pred_region
          %320 = dma.done [#allocation11], 1024
        $region64: #{tpu_custom_call.1} parent=43 // pred_fallthru
          _
        %321 = sfence
        %p322 = pneg %p44
        %p323 = pneg %p41
        %s324 = sand.u32 %s57, 1
        %s325 = scalar_lea.sflag [#allocation3], %s324
        %s326 = sand.u32 %s57, 1
        %s327 = smul.addr %s326, 16
        %s328 = scalar_lea.vmem [#allocation6], %s327
        %p329 = pneg %p70
        %p330 = pneg %p67
        %s331 = sand.u32 %s28, 1
        %s332 = scalar_lea.sflag [#allocation8], %s331
        %s333 = sand.u32 %s83, 1
        %s334 = smul.addr %s333, 16
        %s335 = scalar_lea.vmem [#allocation7], %s334
        %p336 = pneg %p96
        %p337 = pneg %p93
        %p338 = pneg %p117
        %p339 = pneg %p114
        %p340 = pneg %p138
        %p341 = pneg %p135
        %p342 = pneg %p159
        %p343 = pneg %p156
        %p344 = pneg %p185
        %p345 = pneg %p182
        %s346 = sand.u32 %s172, 1
        %s347 = scalar_lea.sflag [#allocation4], %s346
        %s348 = sand.u32 %s172, 1
        %s349 = smul.addr %s348, 16
        %s350 = scalar_lea.vmem [#allocation12], %s349
        %s351 = smul.u32 2, %s28
        %s352 = smul.u32 2, %s28
        %s353 = smul.u32 2, %s28
        %v355 = vld [vmem:[%s299] sm:$0xff]
        %v356 = vld [vmem:[%s299 + $0x8] sm:$0xff]
        %v357 = vld [vmem:[%s308] sm:$0xff]
        %v358 = vld [vmem:[%s308 + $0x8] sm:$0xff]
        %v359 = vpack.c.bf16 %v356, %v355
        %v360 = vld [vmem:[#allocation9] sm:$0xf]
        %v361 = vld [vmem:[#allocation9 + $0x4] sm:$0xf]
        %v362 = vld [vmem:[#allocation9 + $0x8] sm:$0xf]
        %v363 = vld [vmem:[#allocation9 + $0xc] sm:$0xf]
        %v364 = vld [vmem:[#allocation9 + $0x10] sm:$0xf]
        %v365 = vld [vmem:[#allocation9 + $0x14] sm:$0xf]
        %v366 = vld [vmem:[#allocation9 + $0x18] sm:$0xf]
        %v367 = vld [vmem:[#allocation9 + $0x1c] sm:$0xf]
        %v368 = vld [vmem:[#allocation9 + $0x20] sm:$0xf]
        %v369 = vld [vmem:[#allocation9 + $0x24] sm:$0xf]
        %v370 = vld [vmem:[#allocation9 + $0x28] sm:$0xf]
        %v371 = vld [vmem:[#allocation9 + $0x2c] sm:$0xf]
        %v372 = vld [vmem:[#allocation9 + $0x30] sm:$0xf]
        %v373 = vld [vmem:[#allocation9 + $0x34] sm:$0xf]
        %v374 = vld [vmem:[#allocation9 + $0x38] sm:$0xf]
        %v375 = vld [vmem:[#allocation9 + $0x3c] sm:$0xf]
        %v376 = vpack.c.bf16 %v358, %v357
        %v377 = vld [vmem:[#allocation10] sm:$0xf]
        %v378 = vld [vmem:[#allocation10 + $0x4] sm:$0xf]
        %v379 = vld [vmem:[#allocation10 + $0x8] sm:$0xf]
        %v380 = vld [vmem:[#allocation10 + $0xc] sm:$0xf]
        %v381 = vld [vmem:[#allocation10 + $0x10] sm:$0xf]
        %v382 = vld [vmem:[#allocation10 + $0x14] sm:$0xf]
        %v383 = vld [vmem:[#allocation10 + $0x18] sm:$0xf]
        %v384 = vld [vmem:[#allocation10 + $0x1c] sm:$0xf]
        %v385 = vld [vmem:[#allocation10 + $0x20] sm:$0xf]
        %v386 = vld [vmem:[#allocation10 + $0x24] sm:$0xf]
        %v387 = vld [vmem:[#allocation10 + $0x28] sm:$0xf]
        %v388 = vld [vmem:[#allocation10 + $0x2c] sm:$0xf]
        %v389 = vld [vmem:[#allocation10 + $0x30] sm:$0xf]
        %v390 = vld [vmem:[#allocation10 + $0x34] sm:$0xf]
        %v391 = vld [vmem:[#allocation10 + $0x38] sm:$0xf]
        %v392 = vld [vmem:[#allocation10 + $0x3c] sm:$0xf]
        %v409 = vunpack.c.l.b16 %v377
        %v410 = vunpack.c.l.b16 %v378
        %v411 = vunpack.c.l.b16 %v379
        %v412 = vunpack.c.l.b16 %v380
        %v413 = vunpack.c.l.b16 %v381
        %v414 = vunpack.c.l.b16 %v382
        %v415 = vunpack.c.l.b16 %v383
        %v416 = vunpack.c.l.b16 %v384
        %v417 = vunpack.c.l.b16 %v385
        %v418 = vunpack.c.l.b16 %v386
        %v419 = vunpack.c.l.b16 %v387
        %v420 = vunpack.c.l.b16 %v388
        %v421 = vunpack.c.l.b16 %v389
        %v422 = vunpack.c.l.b16 %v390
        %v423 = vunpack.c.l.b16 %v391
        %v424 = vunpack.c.l.b16 %v392
        %v425 = vpack.c.b16 %v410, %v409
        %v426 = vpack.c.b16 %v412, %v411
        %v427 = vpack.c.b16 %v414, %v413
        %v428 = vpack.c.b16 %v416, %v415
        %v429 = vpack.c.b16 %v418, %v417
        %v430 = vpack.c.b16 %v420, %v419
        %v431 = vpack.c.b16 %v422, %v421
        %v432 = vpack.c.b16 %v424, %v423
        %441 = vmatprep.subr.bf16.mxu0 0
        %442 = vmatpush1.bf16.msra.mxu0 %v432
        %443 = vmatprep.subr.bf16.mxu0 0
        %444 = vmatpush1.bf16.msra.mxu0 %v431
        %445 = vmatprep.subr.bf16.mxu0 0
        %446 = vmatpush1.bf16.msra.mxu0 %v430
        %447 = vmatprep.subr.bf16.mxu0 0
        %448 = vmatpush1.bf16.msra.mxu0 %v429
        %449 = vmatprep.subr.bf16.mxu0 0
        %450 = vmatpush1.bf16.msra.mxu0 %v428
        %451 = vmatprep.subr.bf16.mxu0 0
        %452 = vmatpush1.bf16.msra.mxu0 %v427
        %453 = vmatprep.subr.bf16.mxu0 0
        %454 = vmatpush1.bf16.msra.mxu0 %v426
        %455 = vmatprep.subr.bf16.mxu0 0
        %456 = vmatpush1.bf16.msra.mxu0 %v425
        %457 = vmatprep.subr.bf16.mxu0 0
        %458 = vmatpush2.bf16.msra.mxu0 0
        %459 = vmatprep.subr.bf16.mxu0 0
        %460 = vmatpush2.bf16.msra.mxu0 0
        %461 = vmatprep.subr.bf16.mxu0 0
        %462 = vmatpush2.bf16.msra.mxu0 0
        %463 = vmatprep.subr.bf16.mxu0 0
        %464 = vmatpush2.bf16.msra.mxu0 0
        %465 = vmatprep.subr.bf16.mxu0 0
        %466 = vmatpush2.bf16.msra.mxu0 0
        %467 = vmatprep.subr.bf16.mxu0 0
        %468 = vmatpush2.bf16.msra.mxu0 0
        %469 = vmatprep.subr.bf16.mxu0 0
        %470 = vmatpush2.bf16.msra.mxu0 0
        %471 = vmatprep.subr.bf16.mxu0 0
        %472 = vmatpush2.bf16.msra.mxu0 0
        %473 = vmatprep.mubr.bf16.mxu0 0
        %474 = vmatmul.mubr.bf16.gmra.mxu0 %v376
        %v475 = vpop.f32.mrf.mxu0
        %v476 = vadd.f32 0.0, %v475
        %v477 = vpop.f32.mrf.mxu0
        %v478 = vpop.f32.mrf.mxu0
        %v479 = vadd.f32 0.0, %v478
        %v480 = vpop.f32.mrf.mxu0
        %481 = vdwg.mxu0
        %v498 = vunpack.c.l.b16 %v360
        %v499 = vunpack.c.l.b16 %v361
        %v500 = vunpack.c.l.b16 %v362
        %v501 = vunpack.c.l.b16 %v363
        %v502 = vunpack.c.l.b16 %v364
        %v503 = vunpack.c.l.b16 %v365
        %v504 = vunpack.c.l.b16 %v366
        %v505 = vunpack.c.l.b16 %v367
        %v506 = vunpack.c.l.b16 %v368
        %v507 = vunpack.c.l.b16 %v369
        %v508 = vunpack.c.l.b16 %v370
        %v509 = vunpack.c.l.b16 %v371
        %v510 = vunpack.c.l.b16 %v372
        %v511 = vunpack.c.l.b16 %v373
        %v512 = vunpack.c.l.b16 %v374
        %v513 = vunpack.c.l.b16 %v375
        %v514 = vpack.c.b16 %v499, %v498
        %v515 = vpack.c.b16 %v501, %v500
        %v516 = vpack.c.b16 %v503, %v502
        %v517 = vpack.c.b16 %v505, %v504
        %v518 = vpack.c.b16 %v507, %v506
        %v519 = vpack.c.b16 %v509, %v508
        %v520 = vpack.c.b16 %v511, %v510
        %v521 = vpack.c.b16 %v513, %v512
        %530 = vmatprep.subr.bf16.mxu0 0
        %531 = vmatpush1.bf16.msra.mxu0 %v521
        %532 = vmatprep.subr.bf16.mxu0 0
        %533 = vmatpush1.bf16.msra.mxu0 %v520
        %534 = vmatprep.subr.bf16.mxu0 0
        %535 = vmatpush1.bf16.msra.mxu0 %v519
        %536 = vmatprep.subr.bf16.mxu0 0
        %537 = vmatpush1.bf16.msra.mxu0 %v518
        %538 = vmatprep.subr.bf16.mxu0 0
        %539 = vmatpush1.bf16.msra.mxu0 %v517
        %540 = vmatprep.subr.bf16.mxu0 0
        %541 = vmatpush1.bf16.msra.mxu0 %v516
        %542 = vmatprep.subr.bf16.mxu0 0
        %543 = vmatpush1.bf16.msra.mxu0 %v515
        %544 = vmatprep.subr.bf16.mxu0 0
        %545 = vmatpush1.bf16.msra.mxu0 %v514
        %546 = vmatprep.subr.bf16.mxu0 0
        %547 = vmatpush2.bf16.msra.mxu0 0
        %548 = vmatprep.subr.bf16.mxu0 0
        %549 = vmatpush2.bf16.msra.mxu0 0
        %550 = vmatprep.subr.bf16.mxu0 0
        %551 = vmatpush2.bf16.msra.mxu0 0
        %552 = vmatprep.subr.bf16.mxu0 0
        %553 = vmatpush2.bf16.msra.mxu0 0
        %554 = vmatprep.subr.bf16.mxu0 0
        %555 = vmatpush2.bf16.msra.mxu0 0
        %556 = vmatprep.subr.bf16.mxu0 0
        %557 = vmatpush2.bf16.msra.mxu0 0
        %558 = vmatprep.subr.bf16.mxu0 0
        %559 = vmatpush2.bf16.msra.mxu0 0
        %560 = vmatprep.subr.bf16.mxu0 0
        %561 = vmatpush2.bf16.msra.mxu0 0
        %562 = vmatprep.mubr.bf16.mxu0 0
        %563 = vmatmul.mubr.bf16.gmra.mxu0 %v359
        %v564 = vpop.f32.mrf.mxu0
        %v565 = vadd.f32 %v476, %v564
        %v566 = vpop.f32.mrf.mxu0
        %v567 = vpop.f32.mrf.mxu0
        %v568 = vadd.f32 %v479, %v567
        %v569 = vpop.f32.mrf.mxu0
        %570 = vdwg.mxu0
        %v571 = vld [vmem:[%s5] sm:$0x1]
        %v573 = vlaneseq
        %v574 = vshrl.u32 %v573, 7
        %v575 = vsub.s32 0, %v574
        %v576 = vrot.slane %v571, %v575
        %v578 = vadd.f32 %v565, %v576
        %v579 = vadd.f32 %v568, %v576
        %s580 = sld [smem:[#allocation2]]
        %v581 = vadd.f32 %v355, %v357
        %v582 = vadd.f32 %v356, %v358
        %v583 = vstv %s580
        %v584 = vmul.f32 %v583, %v581
        %v585 = vmul.f32 %v583, %v582
        %s586 = sld [smem:[#allocation2 + $0x1]]
        %v587 = vmul.f32 %v355, %v357
        %v588 = vmul.f32 %v356, %v358
        %v589 = vstv %s586
        %v590 = vmul.f32 %v589, %v587
        %v591 = vmul.f32 %v589, %v588
        %v592 = vadd.f32 %v584, %v590
        %v593 = vadd.f32 %v585, %v591
        %v594 = vadd.f32 %v592, %v578
        %v595 = vadd.f32 %v593, %v579
        %596 = vst [vmem:[%s350] sm:$0xff] %v594
        %597 = vst [vmem:[%s350 + $0x8] sm:$0xff] %v595
        %s598 = sand.u32 %s172, 1
        %s599 = scalar_lea.sflag [#allocation4], %s598
        %s600 = sand.u32 %s172, 1
        %s601 = smul.addr %s600, 16
        %s602 = scalar_lea.vmem [#allocation12], %s601
        // Predicated region
        $region65: #{tpu_custom_call.1} parent=43 // pred_check
          %p603 = pneg %p182
        $region66: #{tpu_custom_call.1} parent=43 // pred_check_branch
          %605 = sbr.rel (%p603) target = $region68
        $region67: #{tpu_custom_call.1} parent=43 // pred_region
          %s606 = smul.u32 2, %s28
          %s608 = ssub.s32 256, 256
          %609 = vsyncadd %s599, %s608
          %s610 = smul.addr %s606, 128
          %s611 = scalar_lea.hbm %s6, %s610
          %s612 = sshll.u32 %s602, 4
          %s613 = int_to_ptr.vmem [resolvable:$true] %s612
          %618 = dma.vmem_to_hbm [thread:$0]  %s613, 256, %s611, %s599, 128, 128, 8
        $region68: #{tpu_custom_call.1} parent=43 // pred_fallthru
          _
      $region44: #{tpu_custom_call.1} parent=5 // pred_fallthru
        _
      %p619 = scmp.le.s32.totalorder 2, %s23
      // Predicated region
      $region69: #{tpu_custom_call.1} parent=5 // pred_check
        %p620 = pneg %p619
      $region70: #{tpu_custom_call.1} parent=5 // pred_check_branch
        %622 = sbr.rel (%p620) target = $region72
      $region71: #{tpu_custom_call.1} parent=5 // pred_region
        %s623 = ssub.s32 %s23, 2
        // Predicated region
        $region73: #{tpu_custom_call.1} parent=71 // pred_check
          %p624 = pneg %p188
        $region74: #{tpu_custom_call.1} parent=71 // pred_check_branch
          %626 = sbr.rel (%p624) target = $region76
        $region75: #{tpu_custom_call.1} parent=71 // pred_region
          %s627 = sand.u32 %s173, 1
          %s628 = scalar_lea.sflag [#allocation4], %s627
          %s629 = sand.u32 %s173, 1
          %s630 = smul.addr %s629, 16
          %s631 = scalar_lea.vmem [#allocation12], %s630
          %632 = dma.done %s628, 256
        $region76: #{tpu_custom_call.1} parent=71 // pred_fallthru
          _
      $region72: #{tpu_custom_call.1} parent=5 // pred_fallthru
        _
    $region6: #{tpu_custom_call.1} parent=1 // loop_footer
      %s27 = sadd.s32 1, %s23
    $region7: #{tpu_custom_call.1} parent=1 // loop_footer_branch
      %22 = sbr.rel target = $region3
    $region8: #{tpu_custom_call.1} parent=1 // loop_exit
      _
    %633 = vsyncpa [#allocation3], 1
    %s634 = scalar_lea.sflag [#allocation3], 1
    %635 = vsyncpa %s634, 1
    %636 = vsyncpa [#allocation8], 1
    %s637 = scalar_lea.sflag [#allocation8], 1
    %638 = vsyncpa %s637, 1
    %639 = vsyncpa [#allocation11], 1
    %640 = vsyncpa [#allocation4], 1
    %s641 = scalar_lea.sflag [#allocation4], 1
    %642 = vsyncpa %s641, 1
    %643 = vsyncpa [#allocation5], 1
    %s644 = scalar_lea.sflag [#allocation5], 1
    %645 = vsyncpa %s644, 1

</llo_original>
